<compile_context>
chip_gen: v5e
topology: v5e:2x2
jax: 0.10.0
libtpu: 0.0.40
codegen_flags: <defaults>
</compile_context>

<pallas_src>
import functools

import jax
import jax.numpy as jnp
from jax import lax
from jax.experimental import pallas as pl
from jax.experimental.pallas import tpu as pltpu

LANES = 128
SUBLANES = 8
MAX_TILE_BYTES = 4 * 1024 * 1024   # per input, per pipeline buffer


def _num_tensorcores() -> int:
    """2 on dual-TensorCore chips (v4 / v5p / v7x), 1 on v5e / v6e / others."""
    try:
        dev = jax.devices()[0]
        if dev.platform != "tpu":
            return 1
        kind = dev.device_kind.lower().replace(" ", "")
        # Single-TensorCore chips first (v5e / v6e and their "lite" names).
        if "lite" in kind or "v5e" in kind or "v6e" in kind or "v6" in kind:
            return 1
        # v4 / v5p megacore and v7x dual-TC chips.
        if "v4" in kind or "7" in kind or "v5" in kind:
            return 2
        return 1
    except Exception:
        return 1


def _hinge_kernel(pos_ref, neg_ref, out_ref, acc_ref, *,
                  margin, n_rows, tile_rows, tiles_per_core):
    c = pl.program_id(0)           # TensorCore / partial-sum row
    j = pl.program_id(1)           # reduction step along the flattened data
    nj = pl.num_programs(1)

    @pl.when(j == 0)
    def _init():
        acc_ref[...] = jnp.zeros_like(acc_ref)

    # Cast in-kernel: inputs stay in native dtype in HBM (halves DMA traffic
    # for 16-bit inputs); hinge math and accumulation are done in f32.
    pos = pos_ref[...].astype(jnp.float32)
    neg = neg_ref[...].astype(jnp.float32)
    diff = jnp.maximum(neg - pos + margin, 0.0)

    # Rows of *this* tile that hold real data (local comparison -> no int32
    # flat-index overflow even for very large inputs).  May be <= 0 for the
    # clamped out-of-range tile a second core can be handed, or > tile_rows
    # for fully-covered tiles.
    tile_global = c * tiles_per_core + j
    valid_rows = n_rows - tile_global * tile_rows

    @pl.when(valid_rows >= tile_rows)
    def _full_tile():
        # Leading-axis sum = pure vreg-wise VPU adds into the (8,128) acc.
        acc_ref[...] += diff.reshape(-1, SUBLANES, LANES).sum(axis=0)

    @pl.when(valid_rows < tile_rows)
    def _tail_tile():
        # Partial / out-of-range tile: rows past the true data may contain
        # garbage (undefined OOB reads); jnp.where (select) discards it.
        row_ids = lax.broadcasted_iota(jnp.int32, diff.shape, 0)
        masked = jnp.where(row_ids < valid_rows, diff, 0.0)
        acc_ref[...] += masked.reshape(-1, SUBLANES, LANES).sum(axis=0)

    @pl.when(j == nj - 1)
    def _finalize():
        # Single cross-sublane reduce per core into a lane-dense output row.
        out_ref[...] = jnp.sum(acc_ref[...], axis=0, keepdims=True)


@functools.partial(jax.jit, static_argnames=("margin",))
def hinge_loss(pos, neg, margin):
    assert pos.shape == neg.shape, "pos and neg must have the same shape"
    margin = float(margin)
    pos_flat = pos.reshape(-1)     # free bitcast reshape; native dtype kept
    neg_flat = neg.reshape(-1)

    n = int(pos_flat.shape[0])
    if n == 0:
        return jnp.zeros((), jnp.float32)

    rem = n % LANES
    n_main = n - rem

    tail = None
    if rem:
        # < 128 leftover elements: tiny wrapper-side sum instead of an O(n)
        # padding copy of both inputs.
        tp = lax.slice(pos_flat, (n_main,), (n,)).astype(jnp.float32)
        tg = lax.slice(neg_flat, (n_main,), (n,)).astype(jnp.float32)
        tail = jnp.sum(jnp.maximum(tg - tp + margin, 0.0))

    if n_main == 0:
        return tail

    if rem:
        pos_main = lax.slice(pos_flat, (0,), (n_main,))
        neg_main = lax.slice(neg_flat, (0,), (n_main,))
    else:
        pos_main, neg_main = pos_flat, neg_flat   # zero-copy common case

    rows = n_main // LANES
    pos2d = pos_main.reshape(rows, LANES)
    neg2d = neg_main.reshape(rows, LANES)

    itemsize = int(jnp.dtype(pos.dtype).itemsize)
    cap_rows = max(SUBLANES,
                   (MAX_TILE_BYTES // (LANES * itemsize)) // SUBLANES * SUBLANES)
    rows_up8 = ((rows + SUBLANES - 1) // SUBLANES) * SUBLANES
    tile_rows = int(min(cap_rows, rows_up8))          # multiple of 8 always

    total_tiles = (rows + tile_rows - 1) // tile_rows
    num_cores = min(_num_tensorcores(), total_tiles)
    tiles_per_core = (total_tiles + num_cores - 1) // num_cores

    def in_index_map(c, j):
        t = c * tiles_per_core + j
        # Clamp so the (at most one) grid step past the data never issues an
        # out-of-range HBM DMA; its contribution is masked to zero in-kernel.
        return (jnp.minimum(t, total_tiles - 1), 0)

    kernel = functools.partial(
        _hinge_kernel,
        margin=margin,
        n_rows=int(rows),
        tile_rows=tile_rows,
        tiles_per_core=int(tiles_per_core),
    )

    # 2 inputs x 2 pipeline buffers x tile + small acc/out + headroom.
    tile_bytes = tile_rows * LANES * itemsize
    vmem_limit = int(min(6 * tile_bytes + (4 << 20), 48 << 20))

    cost = pl.CostEstimate(
        flops=4 * n_main,
        transcendentals=0,
        bytes_accessed=2 * n_main * itemsize + num_cores * LANES * 4,
    )

    partials = pl.pallas_call(
        kernel,
        out_shape=jax.ShapeDtypeStruct((num_cores, LANES), jnp.float32),
        grid_spec=pltpu.PrefetchScalarGridSpec(
            num_scalar_prefetch=0,
            grid=(num_cores, tiles_per_core),
            in_specs=[
                pl.BlockSpec((tile_rows, LANES), in_index_map),
                pl.BlockSpec((tile_rows, LANES), in_index_map),
            ],
            out_specs=pl.BlockSpec((1, LANES), lambda c, j: (c, 0)),
            scratch_shapes=[pltpu.VMEM((SUBLANES, LANES), jnp.float32)],
        ),
        compiler_params=pltpu.CompilerParams(
            dimension_semantics=("parallel", "arbitrary"),
            vmem_limit_bytes=vmem_limit,
        ),
        cost_estimate=cost,
    )(pos2d, neg2d)

    loss = jnp.sum(partials)       # (num_cores, 128) lane-dense -> scalar
    if tail is not None:
        loss = loss + tail
    return loss


def hinge_loss_ref(pos, neg, margin):
    return jnp.sum(jnp.maximum(neg - (pos - margin), 0.0))


if __name__ == "__main__":
    margin = 0.5
    key = jax.random.PRNGKey(0)
    kp, kn = jax.random.split(key)
    # Small, deterministic inputs (e.g. batch of pairwise scores).
    pos = jax.random.normal(kp, (2, 4, 16, 16), dtype=jnp.float32)
    neg = jax.random.normal(kn, (2, 4, 16, 16), dtype=jnp.float32)

    loss = hinge_loss(pos, neg, margin)
    jax.block_until_ready(loss)

    ref = hinge_loss_ref(pos, neg, margin)
    assert jnp.allclose(loss, ref, rtol=1e-5, atol=1e-4), (loss, ref)
    print("KERNEL_OK")
</pallas_src>

<mosaic_0001>
module attributes {stable_mosaic.version = 11 : i64} {
  func.func @_hinge_kernel(%arg0: i32, %arg1: i32, %arg2: memref<16x128xf32, #tpu.memory_space<vmem>>, %arg3: memref<16x128xf32, #tpu.memory_space<vmem>>, %arg4: memref<1x128xf32, #tpu.memory_space<vmem>>, %arg5: memref<8x128xf32, #tpu.memory_space<vmem>>) attributes {dimension_semantics = [#tpu.dimension_semantics<parallel>, #tpu.dimension_semantics<arbitrary>], iteration_bounds = array<i64: 1, 1>, scalar_prefetch = 0 : i64, scratch_operands = 1 : i64, tpu.core_type = #tpu.core_type<tc>, window_params = [{transform_indices = @transform_0, window_bounds = array<i64: 16, 128>}, {transform_indices = @transform_1, window_bounds = array<i64: 16, 128>}, {transform_indices = @transform_2, window_bounds = array<i64: 1, 128>}]} {
    %c0_i32 = arith.constant 0 : i32
    %0 = arith.cmpi eq, %arg1, %c0_i32 : i32
    %1 = arith.extui %0 : i1 to i32
    %c0_i32_0 = arith.constant 0 : i32
    %2 = arith.cmpi ne, %1, %c0_i32_0 : i32
    scf.if %2 {
      %cst_12 = arith.constant 0.000000e+00 : f32
      %23 = vector.broadcast %cst_12 : f32 to vector<8x128xf32>
      %c0_13 = arith.constant 0 : index
      %c0_14 = arith.constant 0 : index
      %24 = vector.load %arg5[%c0_13, %c0_14] : memref<8x128xf32, #tpu.memory_space<vmem>>, vector<8x128xf32>
      tpu.vector_store %arg5[%c0_13, %c0_14], %23 {strides = array<i32>} : memref<8x128xf32, #tpu.memory_space<vmem>>, vector<8x128xf32>,
    } else {
    }
    %c0 = arith.constant 0 : index
    %c0_1 = arith.constant 0 : index
    %3 = vector.load %arg2[%c0, %c0_1] : memref<16x128xf32, #tpu.memory_space<vmem>>, vector<16x128xf32>
    %c0_2 = arith.constant 0 : index
    %c0_3 = arith.constant 0 : index
    %4 = vector.load %arg3[%c0_2, %c0_3] : memref<16x128xf32, #tpu.memory_space<vmem>>, vector<16x128xf32>
    %5 = arith.subf %4, %3 : vector<16x128xf32>
    %cst = arith.constant 5.000000e-01 : f32
    %6 = vector.broadcast %cst : f32 to vector<16x128xf32>
    %7 = arith.addf %5, %6 : vector<16x128xf32>
    %cst_4 = arith.constant 0.000000e+00 : f32
    %8 = vector.broadcast %cst_4 : f32 to vector<16x128xf32>
    %9 = arith.maximumf %7, %8 : vector<16x128xf32>
    %c1_i32 = arith.constant 1 : i32
    %10 = arith.muli %arg0, %c1_i32 : i32
    %11 = arith.addi %10, %arg1 : i32
    %c16_i32 = arith.constant 16 : i32
    %12 = arith.muli %11, %c16_i32 : i32
    %c16_i32_5 = arith.constant 16 : i32
    %13 = arith.subi %c16_i32_5, %12 : i32
    %c16_i32_6 = arith.constant 16 : i32
    %14 = arith.cmpi sge, %13, %c16_i32_6 : i32
    %15 = arith.extui %14 : i1 to i32
    %c0_i32_7 = arith.constant 0 : i32
    %16 = arith.cmpi ne, %15, %c0_i32_7 : i32
    scf.if %16 {
      %c0_12 = arith.constant 0 : index
      %c0_13 = arith.constant 0 : index
      %23 = vector.load %arg5[%c0_12, %c0_13] : memref<8x128xf32, #tpu.memory_space<vmem>>, vector<8x128xf32>
      %24 = vector.shape_cast %9 : vector<16x128xf32> to vector<2x8x128xf32>
      %cst_14 = arith.constant dense<0.000000e+00> : vector<8x128xf32>
      %25 = vector.multi_reduction <add>, %24, %cst_14 [0] : vector<2x8x128xf32> to vector<8x128xf32>
      %26 = arith.addf %23, %25 : vector<8x128xf32>
      %c0_15 = arith.constant 0 : index
      %c0_16 = arith.constant 0 : index
      %27 = vector.load %arg5[%c0_15, %c0_16] : memref<8x128xf32, #tpu.memory_space<vmem>>, vector<8x128xf32>
      tpu.vector_store %arg5[%c0_15, %c0_16], %26 {strides = array<i32>} : memref<8x128xf32, #tpu.memory_space<vmem>>, vector<8x128xf32>,
    } else {
    }
    %c16_i32_8 = arith.constant 16 : i32
    %17 = arith.cmpi slt, %13, %c16_i32_8 : i32
    %18 = arith.extui %17 : i1 to i32
    %c0_i32_9 = arith.constant 0 : i32
    %19 = arith.cmpi ne, %18, %c0_i32_9 : i32
    scf.if %19 {
      %23 = tpu.iota {dimensions = array<i32: 0>} : vector<16x128xi32>
      %24 = vector.broadcast %13 : i32 to vector<16x128xi32>
      %25 = arith.cmpi slt, %23, %24 : vector<16x128xi32>
      %cst_12 = arith.constant 0.000000e+00 : f32
      %26 = vector.broadcast %cst_12 : f32 to vector<16x128xf32>
      %27 = arith.select %25, %9, %26 : vector<16x128xi1>, vector<16x128xf32>
      %c0_13 = arith.constant 0 : index
      %c0_14 = arith.constant 0 : index
      %28 = vector.load %arg5[%c0_13, %c0_14] : memref<8x128xf32, #tpu.memory_space<vmem>>, vector<8x128xf32>
      %29 = vector.shape_cast %27 : vector<16x128xf32> to vector<2x8x128xf32>
      %cst_15 = arith.constant dense<0.000000e+00> : vector<8x128xf32>
      %30 = vector.multi_reduction <add>, %29, %cst_15 [0] : vector<2x8x128xf32> to vector<8x128xf32>
      %31 = arith.addf %28, %30 : vector<8x128xf32>
      %c0_16 = arith.constant 0 : index
      %c0_17 = arith.constant 0 : index
      %32 = vector.load %arg5[%c0_16, %c0_17] : memref<8x128xf32, #tpu.memory_space<vmem>>, vector<8x128xf32>
      tpu.vector_store %arg5[%c0_16, %c0_17], %31 {strides = array<i32>} : memref<8x128xf32, #tpu.memory_space<vmem>>, vector<8x128xf32>,
    } else {
    }
    %c0_i32_10 = arith.constant 0 : i32
    %20 = arith.cmpi eq, %arg1, %c0_i32_10 : i32
    %21 = arith.extui %20 : i1 to i32
    %c0_i32_11 = arith.constant 0 : i32
    %22 = arith.cmpi ne, %21, %c0_i32_11 : i32
    scf.if %22 {
      %c0_12 = arith.constant 0 : index
      %c0_13 = arith.constant 0 : index
      %23 = vector.load %arg5[%c0_12, %c0_13] : memref<8x128xf32, #tpu.memory_space<vmem>>, vector<8x128xf32>
      %cst_14 = arith.constant dense<0.000000e+00> : vector<128xf32>
      %24 = vector.multi_reduction <add>, %23, %cst_14 [0] : vector<8x128xf32> to vector<128xf32>
      %25 = vector.shape_cast %24 : vector<128xf32> to vector<1x128xf32>
      %c0_15 = arith.constant 0 : index
      %c0_16 = arith.constant 0 : index
      %26 = vector.load %arg4[%c0_15, %c0_16] : memref<1x128xf32, #tpu.memory_space<vmem>>, vector<1x128xf32>
      tpu.vector_store %arg4[%c0_15, %c0_16], %25 {strides = array<i32>} : memref<1x128xf32, #tpu.memory_space<vmem>>, vector<1x128xf32>,
    } else {
    }
    return
  }
  func.func @transform_0(%arg0: i32, %arg1: i32) -> (i32, i32) {
    %c1_i32 = arith.constant 1 : i32
    %0 = arith.muli %arg0, %c1_i32 : i32
    %1 = arith.addi %0, %arg1 : i32
    %c0_i32 = arith.constant 0 : i32
    %2 = arith.minsi %1, %c0_i32 : i32
    %c0_i32_0 = arith.constant 0 : i32
    %c0_i32_1 = arith.constant 0 : i32
    return %2, %c0_i32_0 : i32, i32
  }
  func.func @transform_1(%arg0: i32, %arg1: i32) -> (i32, i32) {
    %c1_i32 = arith.constant 1 : i32
    %0 = arith.muli %arg0, %c1_i32 : i32
    %1 = arith.addi %0, %arg1 : i32
    %c0_i32 = arith.constant 0 : i32
    %2 = arith.minsi %1, %c0_i32 : i32
    %c0_i32_0 = arith.constant 0 : i32
    %c0_i32_1 = arith.constant 0 : i32
    return %2, %c0_i32_0 : i32, i32
  }
  func.func @transform_2(%arg0: i32, %arg1: i32) -> (i32, i32) {
    %c0_i32 = arith.constant 0 : i32
    %c0_i32_0 = arith.constant 0 : i32
    return %arg0, %c0_i32 : i32, i32
  }
}

</mosaic_0001>

<llo_original>
// kernel: hinge_loss.1
$region0: #{hinge_loss.1}
  #allocation0 [shape = 'u32[]', space=smem, size = 0x4, offset = 0x4, fixed_abs, tag = 'smem constant byte address 0x4 - core index']
  #allocation1 [shape = 'u32[72,128]{1,0:T(1,128)}', space=vmem, size = 0x9000, scoped, tag = 'internal scratch']
  #allocation2 [shape = 'f32[8,128]{1,0:T(8,128)}', space=vmem, size = 0x1000, scoped, tag = 'scratch operand']
  %s0 = inlined_call_operand.vmem [shape: f32[16,128], index: 0, kind: input, shape index: {}]
  %s1 = inlined_call_operand.vmem [shape: f32[16,128], index: 1, kind: input, shape index: {}]
  %s2 = inlined_call_operand.vmem [shape: f32[1,128], index: 2, kind: output, shape index: {}]
  %s3 = sld [smem:[#allocation0]]
  $region34: #{hinge_loss.1} parent=0
    _
  %s5 = ssub.s32 1, %s3
  %s6 = scalar_select 0, %s5, %s3
  // Predicated region
  $region2: #{hinge_loss.1} parent=0 // pred_check
    _
  $region3: #{hinge_loss.1} parent=0 // pred_check_branch
    %8 = sbr.rel (0) target = $region5
  $region4: #{hinge_loss.1} parent=0 // pred_region
    %s9 = sadd.s32 0, 0
    %p10 = scmp.lt.s32.totalorder %s9, 0
    %s11 = scalar_select %p10, %s9, 0
    %s12 = smul.u32 2, %s11
    %p13 = scmp.lt.s32.totalorder %s12, 1
    %s14 = scalar_select %p13, %s12, 1
    %s15 = smul.addr %s14, 8
    %s16 = scalar_lea.vmem %s0, %s15
    %s17 = sadd.s32 0, 0
    %p18 = scmp.lt.s32.totalorder %s17, 0
    %s19 = scalar_select %p18, %s17, 0
    %s20 = smul.u32 2, %s19
  $region5: #{hinge_loss.1} parent=0 // pred_fallthru
    _
  // Predicated region
  $region6: #{hinge_loss.1} parent=0 // pred_check
    _
  $region7: #{hinge_loss.1} parent=0 // pred_check_branch
    %22 = sbr.rel (0) target = $region9
  $region8: #{hinge_loss.1} parent=0 // pred_region
    %s23 = sadd.s32 0, 0
    %p24 = scmp.lt.s32.totalorder %s23, 0
    %s25 = scalar_select %p24, %s23, 0
    %s26 = smul.u32 2, %s25
    %p27 = scmp.lt.s32.totalorder %s26, 1
    %s28 = scalar_select %p27, %s26, 1
    %s29 = smul.addr %s28, 8
    %s30 = scalar_lea.vmem %s1, %s29
    %s31 = sadd.s32 0, 0
    %p32 = scmp.lt.s32.totalorder %s31, 0
    %s33 = scalar_select %p32, %s31, 0
    %s34 = smul.u32 2, %s33
  $region9: #{hinge_loss.1} parent=0 // pred_fallthru
    _
  %s35 = sadd.s32 0, 0
  %p36 = scmp.lt.s32.totalorder %s35, 0
  %s37 = scalar_select %p36, %s35, 0
  %s38 = smul.u32 2, %s37
  %p39 = scmp.lt.s32.totalorder %s38, 1
  %s40 = scalar_select %p39, %s38, 1
  %s41 = smul.addr %s40, 8
  %s42 = scalar_lea.vmem %s0, %s41
  %s43 = sadd.s32 0, 0
  %p44 = scmp.lt.s32.totalorder %s43, 0
  %s45 = scalar_select %p44, %s43, 0
  %s46 = smul.u32 2, %s45
  %p47 = scmp.lt.s32.totalorder %s46, 1
  %s48 = scalar_select %p47, %s46, 1
  %s49 = smul.addr %s48, 8
  %s50 = scalar_lea.vmem %s1, %s49
  %s51 = sadd.s32 0, 0
  %p52 = scmp.lt.s32.totalorder %s51, 0
  %s53 = scalar_select %p52, %s51, 0
  %s54 = smul.u32 2, %s53
  %p55 = scmp.lt.s32.totalorder %s54, 1
  %s56 = scalar_select %p55, %s54, 1
  %s57 = smul.addr %s56, 8
  %s58 = scalar_lea.vmem %s0, %s57
  %s59 = sadd.s32 0, 0
  %p60 = scmp.lt.s32.totalorder %s59, 0
  %s61 = scalar_select %p60, %s59, 0
  %s62 = smul.u32 2, %s61
  %s63 = sadd.s32 0, 0
  %p64 = scmp.lt.s32.totalorder %s63, 0
  %s65 = scalar_select %p64, %s63, 0
  %s66 = smul.u32 2, %s65
  %p67 = scmp.lt.s32.totalorder %s66, 1
  %s68 = scalar_select %p67, %s66, 1
  %s69 = smul.addr %s68, 8
  %s70 = scalar_lea.vmem %s1, %s69
  %s71 = sadd.s32 0, 0
  %p72 = scmp.lt.s32.totalorder %s71, 0
  %s73 = scalar_select %p72, %s71, 0
  %s74 = smul.u32 2, %s73
  %p75 = scmp.eq.s32.totalorder 0, 0
  // Predicated region
  $region10: #{hinge_loss.1} parent=0 // pred_check
    %p76 = pneg %p75
  $region11: #{hinge_loss.1} parent=0 // pred_check_branch
    %78 = sbr.rel (%p76) target = $region13
  $region12: #{hinge_loss.1} parent=0 // pred_region
    %79 = vst [vmem:[#allocation2] sm:$0xff] 0.0
  $region13: #{hinge_loss.1} parent=0 // pred_fallthru
    _
  %v80 = vld [vmem:[%s58] sm:$0xff]
  %v81 = vld [vmem:[%s58 + $0x8] sm:$0xff]
  %v82 = vld [vmem:[%s70] sm:$0xff]
  %v83 = vld [vmem:[%s70 + $0x8] sm:$0xff]
  %v84 = vsub.f32 %v82, %v80
  %v85 = vsub.f32 %v83, %v81
  %v86 = vadd.f32 %v84, 0.5
  %v87 = vadd.f32 %v85, 0.5
  %v88 = vmax.f32 %v86, 0.0
  %v89 = vmax.f32 %v87, 0.0
  %s90 = sadd.s32 0, 0
  %s91 = smul.u32 %s90, 16
  %s92 = ssub.s32 16, %s91
  %p93 = scmp.ge.s32.totalorder %s92, 16
  // Predicated region
  $region14: #{hinge_loss.1} parent=0 // pred_check
    %p94 = pneg %p93
  $region15: #{hinge_loss.1} parent=0 // pred_check_branch
    %96 = sbr.rel (%p94) target = $region17
  $region16: #{hinge_loss.1} parent=0 // pred_region
    %v97 = vld [vmem:[#allocation2] sm:$0xff]
    %v98 = vadd.f32 %v88, %v89
    %v99 = vadd.f32 %v97, %v98
    %100 = vst [vmem:[#allocation2] sm:$0xff] %v99
  $region17: #{hinge_loss.1} parent=0 // pred_fallthru
    _
  %p101 = scmp.lt.s32.totalorder %s92, 16
  // Predicated region
  $region18: #{hinge_loss.1} parent=0 // pred_check
    %p102 = pneg %p101
  $region19: #{hinge_loss.1} parent=0 // pred_check_branch
    %104 = sbr.rel (%p102) target = $region21
  $region20: #{hinge_loss.1} parent=0 // pred_region
    %v105 = vlaneseq
    %v106 = vshrl.u32 %v105, 7
    %v107 = vadd.s32 %v106, 8
    %v108 = vstv %s92
    %vm109 = vcmp.lt.s32.totalorder %v106, %v108
    %vm110 = vcmp.lt.s32.totalorder %v107, %v108
    %v111 = vsel %vm109, %v88, 0.0
    %v112 = vsel %vm110, %v89, 0.0
    %v113 = vld [vmem:[#allocation2] sm:$0xff]
    %v114 = vadd.f32 %v111, %v112
    %v115 = vadd.f32 %v113, %v114
    %116 = vst [vmem:[#allocation2] sm:$0xff] %v115
  $region21: #{hinge_loss.1} parent=0 // pred_fallthru
    _
  // Predicated region
  $region22: #{hinge_loss.1} parent=0 // pred_check
    %p117 = pneg %p75
  $region23: #{hinge_loss.1} parent=0 // pred_check_branch
    %119 = sbr.rel (%p117) target = $region25
  $region24: #{hinge_loss.1} parent=0 // pred_region
    %v120 = vld [vmem:[#allocation2] sm:$0xff]
    %v121 = vrot.slane %v120, 4
    %v122 = vadd.f32 %v120, %v121
    %v123 = vrot.slane %v122, 2
    %v124 = vadd.f32 %v122, %v123
    %v125 = vrot.slane %v124, 1
    %v126 = vadd.f32 %v124, %v125
    %127 = vst [vmem:[%s2] sm:$0x1] %v126
  $region25: #{hinge_loss.1} parent=0 // pred_fallthru
    _
  // Predicated region
  $region26: #{hinge_loss.1} parent=0 // pred_check
    _
  $region27: #{hinge_loss.1} parent=0 // pred_check_branch
    %129 = sbr.rel (0) target = $region29
  $region28: #{hinge_loss.1} parent=0 // pred_region
    _
  $region29: #{hinge_loss.1} parent=0 // pred_fallthru
    _
  // Predicated region
  $region30: #{hinge_loss.1} parent=0 // pred_check
    _
  $region31: #{hinge_loss.1} parent=0 // pred_check_branch
    %131 = sbr.rel (0) target = $region33
  $region32: #{hinge_loss.1} parent=0 // pred_region
    _
  $region33: #{hinge_loss.1} parent=0 // pred_fallthru
    _

</llo_original>
